<compile_context>
chip_gen: v7x
topology: tpu7x:2x2x1
jax: 0.10.0
libtpu: 0.0.40
codegen_flags: <defaults>
</compile_context>

<pallas_src>
import functools

import jax
import jax.numpy as jnp
from jax.experimental import pallas as pl
from jax.experimental.pallas import tpu as pltpu


def _dtype_limits(dt):
    dt = jnp.dtype(dt)
    if jnp.issubdtype(dt, jnp.floating):
        return jnp.asarray(-jnp.inf, dt), jnp.asarray(jnp.inf, dt)
    if jnp.issubdtype(dt, jnp.integer):
        ii = jnp.iinfo(dt)
        return jnp.asarray(ii.min, dt), jnp.asarray(ii.max, dt)
    raise TypeError(f"max-pool kernel supports float/int dtypes, got {dt}")


def _maxpool3x3_flat_kernel(x_ref, o_ref, *, H, W):
    # x_ref / o_ref: (ct, H*W); lanes hold the row-major flattened spatial dims.
    x = x_ref[...]
    HW = H * W
    lo, hi = _dtype_limits(x.dtype)

    # Border pass-through masks, shape (1, HW): `hi` (no-op under minimum) where
    # the shifted neighbour is valid, `lo` where the roll wrapped across a
    # border so it can never win the max. Computed at 1/ct of the block size
    # and broadcast by jnp.minimum (one VPU op per shifted operand).
    lane = jax.lax.broadcasted_iota(jnp.int32, (1, HW), 1)
    col = lane % W
    m_left = jnp.where(col == 0, lo, hi)              # neighbour (r, c-1) invalid
    m_right = jnp.where(col == W - 1, lo, hi)         # neighbour (r, c+1) invalid
    m_up = jnp.where(lane < W, lo, hi)                # neighbour (r-1, c) invalid
    m_down = jnp.where(lane >= (H - 1) * W, lo, hi)   # neighbour (r+1, c) invalid

    # Horizontal 3-tap max: lane rolls by +/-1.
    x_l = jnp.minimum(pltpu.roll(x, shift=1, axis=1), m_left)
    x_r = jnp.minimum(pltpu.roll(x, shift=HW - 1, axis=1), m_right)
    h = jnp.maximum(jnp.maximum(x_l, x), x_r)

    # Vertical 3-tap max: lane rolls by +/-W (row stride in the flat layout).
    h_u = jnp.minimum(pltpu.roll(h, shift=W, axis=1), m_up)
    h_d = jnp.minimum(pltpu.roll(h, shift=HW - W, axis=1), m_down)
    o_ref[...] = jnp.maximum(jnp.maximum(h_u, h), h_d)


def _maxpool3x3_2d_kernel(x_ref, o_ref):
    # x_ref / o_ref: (ct, H, W) with W a multiple of 128 (already lane-dense).
    x = x_ref[...]
    _, H, W = x.shape
    lo, hi = _dtype_limits(x.dtype)

    col = jax.lax.broadcasted_iota(jnp.int32, (1, H, W), 2)
    row = jax.lax.broadcasted_iota(jnp.int32, (1, H, W), 1)
    m_left = jnp.where(col == 0, lo, hi)
    m_right = jnp.where(col == W - 1, lo, hi)
    m_up = jnp.where(row == 0, lo, hi)
    m_down = jnp.where(row == H - 1, lo, hi)

    x_l = jnp.minimum(pltpu.roll(x, shift=1, axis=2), m_left)
    x_r = jnp.minimum(pltpu.roll(x, shift=W - 1, axis=2), m_right)
    h = jnp.maximum(jnp.maximum(x_l, x), x_r)

    h_u = jnp.minimum(pltpu.roll(h, shift=1, axis=1), m_up)
    h_d = jnp.minimum(pltpu.roll(h, shift=H - 1, axis=1), m_down)
    o_ref[...] = jnp.maximum(jnp.maximum(h_u, h), h_d)


def _round_up(x, m):
    return ((x + m - 1) // m) * m


def _sublane_multiple(itemsize):
    return {4: 8, 2: 16, 1: 32}.get(itemsize, 8)


def _vmem_limit_bytes():
    cap = None
    try:
        cap = getattr(pltpu.get_tpu_info(), "vmem_capacity_bytes", None)
    except Exception:
        cap = None
    if not cap:
        cap = 64 * 1024 * 1024  # conservative fallback: v7x per-TensorCore VMEM
    # ~3/4 of physical, capped at 100 MiB: ~48 MiB on v7x, ~96 MiB on v5e/v6e.
    return int(min(cap * 3 // 4, 100 * 1024 * 1024))


def _pick_channel_tile(nc, per_chan_bytes, align, block_budget, min_steps=8):
    """Channels per block: VMEM-capped, sublane-aligned, >= min_steps grid steps."""
    cap = max(1, block_budget // max(1, per_chan_bytes))
    if cap >= nc:
        # Whole channel axis fits a block; still split to get a few grid steps
        # (pipelining + megacore) when that keeps blocks sublane-aligned.
        target = pl.cdiv(nc, min_steps)
        if target >= align:
            return (target // align) * align
        return nc
    if cap >= align:
        return (cap // align) * align
    # Extremely large per-channel plane: fall back to whatever fits.
    return cap


def pooling_forward(x):
    """POOLING.forward: nn.MaxPool2d(kernel_size=3, stride=1, padding=1).

    x: (N, C, H, W) array. Returns (N, C, H, W) of the same dtype.
    """
    N, C, H, W = x.shape
    NC = N * C
    dt = x.dtype
    itemsize = jnp.dtype(dt).itemsize
    sub = _sublane_multiple(itemsize)
    vmem_limit = _vmem_limit_bytes()
    # 2 pipeline buffers x (input + output) blocks ~= half the VMEM limit.
    block_budget = vmem_limit // 8

    use_flat = (W % 128) != 0
    if use_flat:
        # Flatten spatial dims onto the lane axis (free reshape: H*W contiguous
        # in NCHW) -> lane-dense blocks, unmasked stores, wide DMA rows.
        HW = H * W
        per_chan = _round_up(HW, 128) * itemsize            # padded lane footprint
        ct = _pick_channel_tile(NC, per_chan, sub, block_budget)
        grid = (pl.cdiv(NC, ct),)
        xr = x.reshape(NC, HW)
        kernel = functools.partial(_maxpool3x3_flat_kernel, H=H, W=W)
        in_specs = [pl.BlockSpec((ct, HW), lambda i: (i, 0))]
        out_specs = pl.BlockSpec((ct, HW), lambda i: (i, 0))
        out_shape = jax.ShapeDtypeStruct((NC, HW), dt)
    else:
        # W already a lane multiple: keep the (ct, H, W) layout.
        per_chan = _round_up(H, sub) * W * itemsize         # padded sublane footprint
        ct = _pick_channel_tile(NC, per_chan, 1, block_budget)
        grid = (pl.cdiv(NC, ct),)
        xr = x.reshape(NC, H, W)
        kernel = _maxpool3x3_2d_kernel
        in_specs = [pl.BlockSpec((ct, H, W), lambda i: (i, 0, 0))]
        out_specs = pl.BlockSpec((ct, H, W), lambda i: (i, 0, 0))
        out_shape = jax.ShapeDtypeStruct((NC, H, W), dt)

    out = pl.pallas_call(
        kernel,
        out_shape=out_shape,
        grid_spec=pltpu.PrefetchScalarGridSpec(
            num_scalar_prefetch=0,
            grid=grid,
            in_specs=in_specs,
            out_specs=out_specs,
        ),
        compiler_params=pltpu.CompilerParams(
            dimension_semantics=("parallel",),
            vmem_limit_bytes=vmem_limit,
        ),
        cost_estimate=pl.CostEstimate(
            flops=8 * NC * H * W,
            transcendentals=0,
            bytes_accessed=2 * NC * H * W * itemsize,
        ),
    )(xr)
    return out.reshape(N, C, H, W)


if __name__ == "__main__":
    # POOLING has no learnable parameters (MaxPool2d only); nothing to init.
    key = jax.random.PRNGKey(0)
    x = jax.random.normal(key, (2, 4, 16, 16), dtype=jnp.float32)

    out = jax.block_until_ready(pooling_forward(x))

    # Reference: lax.reduce_window (same semantics as MaxPool2d(3, 1, 1)).
    ref = jax.lax.reduce_window(
        x, -jnp.inf, jax.lax.max,
        window_dimensions=(1, 1, 3, 3),
        window_strides=(1, 1, 1, 1),
        padding=((0, 0), (0, 0), (1, 1), (1, 1)),
    )
    assert out.shape == (2, 4, 16, 16)
    assert jnp.allclose(out, ref), "mismatch vs reference max-pool"

    print("KERNEL_OK")
</pallas_src>

<mosaic_0001>
module attributes {stable_mosaic.version = 11 : i64} {
  func.func @_maxpool3x3_flat_kernel(%arg0: i32, %arg1: memref<8x256xf32, #tpu.memory_space<vmem>>, %arg2: memref<8x256xf32, #tpu.memory_space<vmem>>) attributes {dimension_semantics = [#tpu.dimension_semantics<parallel>], iteration_bounds = array<i64: 1>, scalar_prefetch = 0 : i64, scratch_operands = 0 : i64, tpu.core_type = #tpu.core_type<tc>, window_params = [{transform_indices = @transform_0, window_bounds = array<i64: 8, 256>}, {transform_indices = @transform_1, window_bounds = array<i64: 8, 256>}]} {
    %c0 = arith.constant 0 : index
    %c0_0 = arith.constant 0 : index
    %0 = vector.load %arg1[%c0, %c0_0] : memref<8x256xf32, #tpu.memory_space<vmem>>, vector<8x256xf32>
    %1 = tpu.iota {dimensions = array<i32: 1>} : vector<1x256xi32>
    %c16_i32 = arith.constant 16 : i32
    %c0_i32 = arith.constant 0 : i32
    %2 = arith.cmpi eq, %c16_i32, %c0_i32 : i32
    %c1_i32 = arith.constant 1 : i32
    %3 = arith.select %2, %c1_i32, %c16_i32 : i32
    %4 = vector.broadcast %3 : i32 to vector<1x256xi32>
    %5 = arith.remsi %1, %4 : vector<1x256xi32>
    %c0_i32_1 = arith.constant 0 : i32
    %6 = vector.broadcast %c0_i32_1 : i32 to vector<1x256xi32>
    %7 = arith.cmpi ne, %5, %6 : vector<1x256xi32>
    %c0_i32_2 = arith.constant 0 : i32
    %8 = vector.broadcast %c0_i32_2 : i32 to vector<1x256xi32>
    %9 = arith.cmpi slt, %5, %8 : vector<1x256xi32>
    %c0_i32_3 = arith.constant 0 : i32
    %10 = arith.cmpi slt, %3, %c0_i32_3 : i32
    %11 = vector.broadcast %10 : i1 to vector<1x256xi1>
    %12 = vector.broadcast %11 : vector<1x256xi1> to vector<1x256xi1>
    %13 = arith.xori %9, %12 : vector<1x256xi1>
    %14 = arith.andi %13, %7 : vector<1x256xi1>
    %15 = vector.broadcast %3 : i32 to vector<1x256xi32>
    %16 = arith.addi %5, %15 : vector<1x256xi32>
    %17 = arith.select %14, %16, %5 : vector<1x256xi1>, vector<1x256xi32>
    %c0_i32_4 = arith.constant 0 : i32
    %18 = vector.broadcast %c0_i32_4 : i32 to vector<1x256xi32>
    %19 = arith.cmpi eq, %17, %18 : vector<1x256xi32>
    %cst = arith.constant 0xFF800000 : f32
    %cst_5 = arith.constant 0x7F800000 : f32
    %20 = vector.broadcast %cst : f32 to vector<1x256xf32>
    %21 = vector.broadcast %cst_5 : f32 to vector<1x256xf32>
    %22 = arith.select %19, %20, %21 : vector<1x256xi1>, vector<1x256xf32>
    %c15_i32 = arith.constant 15 : i32
    %23 = vector.broadcast %c15_i32 : i32 to vector<1x256xi32>
    %24 = arith.cmpi eq, %17, %23 : vector<1x256xi32>
    %cst_6 = arith.constant 0xFF800000 : f32
    %cst_7 = arith.constant 0x7F800000 : f32
    %25 = vector.broadcast %cst_6 : f32 to vector<1x256xf32>
    %26 = vector.broadcast %cst_7 : f32 to vector<1x256xf32>
    %27 = arith.select %24, %25, %26 : vector<1x256xi1>, vector<1x256xf32>
    %c16_i32_8 = arith.constant 16 : i32
    %28 = vector.broadcast %c16_i32_8 : i32 to vector<1x256xi32>
    %29 = arith.cmpi slt, %1, %28 : vector<1x256xi32>
    %cst_9 = arith.constant 0xFF800000 : f32
    %cst_10 = arith.constant 0x7F800000 : f32
    %30 = vector.broadcast %cst_9 : f32 to vector<1x256xf32>
    %31 = vector.broadcast %cst_10 : f32 to vector<1x256xf32>
    %32 = arith.select %29, %30, %31 : vector<1x256xi1>, vector<1x256xf32>
    %c240_i32 = arith.constant 240 : i32
    %33 = vector.broadcast %c240_i32 : i32 to vector<1x256xi32>
    %34 = arith.cmpi sge, %1, %33 : vector<1x256xi32>
    %cst_11 = arith.constant 0xFF800000 : f32
    %cst_12 = arith.constant 0x7F800000 : f32
    %35 = vector.broadcast %cst_11 : f32 to vector<1x256xf32>
    %36 = vector.broadcast %cst_12 : f32 to vector<1x256xf32>
    %37 = arith.select %34, %35, %36 : vector<1x256xi1>, vector<1x256xf32>
    %c1_i32_13 = arith.constant 1 : i32
    %38 = tpu.dynamic_rotate %0 by %c1_i32_13 dim 1 : vector<8x256xf32>, i32 -> vector<8x256xf32>
    %39 = vector.broadcast %22 : vector<1x256xf32> to vector<8x256xf32>
    %40 = arith.minimumf %38, %39 : vector<8x256xf32>
    %c255_i32 = arith.constant 255 : i32
    %41 = tpu.dynamic_rotate %0 by %c255_i32 dim 1 : vector<8x256xf32>, i32 -> vector<8x256xf32>
    %42 = vector.broadcast %27 : vector<1x256xf32> to vector<8x256xf32>
    %43 = arith.minimumf %41, %42 : vector<8x256xf32>
    %44 = arith.maximumf %40, %0 : vector<8x256xf32>
    %45 = arith.maximumf %44, %43 : vector<8x256xf32>
    %c16_i32_14 = arith.constant 16 : i32
    %46 = tpu.dynamic_rotate %45 by %c16_i32_14 dim 1 : vector<8x256xf32>, i32 -> vector<8x256xf32>
    %47 = vector.broadcast %32 : vector<1x256xf32> to vector<8x256xf32>
    %48 = arith.minimumf %46, %47 : vector<8x256xf32>
    %c240_i32_15 = arith.constant 240 : i32
    %49 = tpu.dynamic_rotate %45 by %c240_i32_15 dim 1 : vector<8x256xf32>, i32 -> vector<8x256xf32>
    %50 = vector.broadcast %37 : vector<1x256xf32> to vector<8x256xf32>
    %51 = arith.minimumf %49, %50 : vector<8x256xf32>
    %52 = arith.maximumf %48, %45 : vector<8x256xf32>
    %53 = arith.maximumf %52, %51 : vector<8x256xf32>
    %c0_16 = arith.constant 0 : index
    %c0_17 = arith.constant 0 : index
    %54 = vector.load %arg2[%c0_16, %c0_17] : memref<8x256xf32, #tpu.memory_space<vmem>>, vector<8x256xf32>
    tpu.vector_store %arg2[%c0_16, %c0_17], %53 {strides = array<i32>} : memref<8x256xf32, #tpu.memory_space<vmem>>, vector<8x256xf32>,
    return
  }
  func.func @transform_0(%arg0: i32) -> (i32, i32) {
    %c0_i32 = arith.constant 0 : i32
    %c0_i32_0 = arith.constant 0 : i32
    return %arg0, %c0_i32 : i32, i32
  }
  func.func @transform_1(%arg0: i32) -> (i32, i32) {
    %c0_i32 = arith.constant 0 : i32
    %c0_i32_0 = arith.constant 0 : i32
    return %arg0, %c0_i32 : i32, i32
  }
}

</mosaic_0001>

<llo_original>
// kernel: tpu_custom_call.1
$region0: #{tpu_custom_call.1}
  #allocation0 [shape = 'u32[]', space=smem, size = 0x4, offset = 0x4, fixed_abs, tag = 'smem constant byte address 0x4 - core index']
  #allocation1 [shape = 'u32[144,128]{1,0:T(1,128)}', space=vmem, size = 0x12000, scoped, tag = 'internal scratch']
  %s0 = inlined_call_operand.hbm [shape: f32[8,256], index: 0, kind: input, shape index: {}]
  %s1 = inlined_call_operand.hbm [shape: f32[8,256], index: 1, kind: output, shape index: {}]
  %s2 = sld [smem:[#allocation0]]
  $region18: #{tpu_custom_call.1} parent=0
    _
  %s4 = ssub.s32 1, %s2
  %s5 = scalar_select 0, %s4, %s2
  $region1: #{tpu_custom_call.1} parent=0
    #allocation2 [shape = 'u8[8192]{0}', space=vmem, size = 0x2000, scoped, tag = 'input window, operand 0, single buffered']
    #allocation3 [shape = 's32[1]{0}', space=sflag, size = 0x4, scoped, tag = 'scoped memory for tpu_custom_call.1']
    #allocation4 [shape = 's32[1]{0}', space=sflag, size = 0x4, scoped, tag = 'scoped memory for tpu_custom_call.1']
    #allocation5 [shape = 'u8[8192]{0}', space=vmem, size = 0x2000, scoped, tag = 'output window, operand 0, single buffered']
    %6 = vsyncpa [#allocation3], 0
    %7 = vsyncpa [#allocation4], 0
    // Predicated region
    $region2: #{tpu_custom_call.1} parent=1 // pred_check
      _
    $region3: #{tpu_custom_call.1} parent=1 // pred_check_branch
      %9 = sbr.rel (0) target = $region5
    $region4: #{tpu_custom_call.1} parent=1 // pred_region
      %s11 = ssub.s32 256, 256
      %12 = vsyncadd [#allocation3], %s11
      %s14 = sshll.u32 [#allocation2], 4
      %s15 = int_to_ptr.vmem [resolvable:$true] %s14
      %17 = dma.hbm_to_vmem [thread:$0]  %s0, 256, %s15, [#allocation3]
    $region5: #{tpu_custom_call.1} parent=1 // pred_fallthru
      _
    // Predicated region
    $region6: #{tpu_custom_call.1} parent=1 // pred_check
      _
    $region7: #{tpu_custom_call.1} parent=1 // pred_check_branch
      %19 = sbr.rel (0) target = $region9
    $region8: #{tpu_custom_call.1} parent=1 // pred_region
      %20 = dma.done [#allocation3], 256
    $region9: #{tpu_custom_call.1} parent=1 // pred_fallthru
      _
    %v21 = vld [vmem:[#allocation2] sm:$0xff]
    %v22 = vld [vmem:[#allocation2 + $0x8] sm:$0xff]
    %v23 = vlaneseq
    %v24 = vand.u32 %v23, 127
    %v25 = vadd.s32 %v24, 128
    %vm26 = vcmp.lt.s32.totalorder %v24, 0
    %v27 = vsub.s32 0, %v24
    %v28 = vsel %vm26, %v27, %v24
    %v29 = vshrl.u32 %v28, 4
    %v30 = vand.u32 %v28, 15
    %v31 = vsub.s32 0, %v30
    %v32 = vsel %vm26, %v31, %v30
    %vm33 = vcmp.lt.s32.totalorder %v25, 0
    %v34 = vsub.s32 0, %v25
    %v35 = vsel %vm33, %v34, %v25
    %v36 = vshrl.u32 %v35, 4
    %v37 = vand.u32 %v35, 15
    %v38 = vsub.s32 0, %v37
    %v39 = vsel %vm33, %v38, %v37
    %vm40 = vcmp.ne.s32.totalorder %v32, 0
    %vm41 = vcmp.ne.s32.totalorder %v39, 0
    %vm42 = vcmp.lt.s32.totalorder %v32, 0
    %vm43 = vcmp.lt.s32.totalorder %v39, 0
    %vm44 = vmand %vm42, %vm40
    %vm45 = vmand %vm43, %vm41
    %v46 = vadd.s32 %v32, 16
    %v47 = vadd.s32 %v39, 16
    %v48 = vsel %vm44, %v46, %v32
    %v49 = vsel %vm45, %v47, %v39
    %vm50 = vcmp.eq.s32.totalorder %v48, 0
    %vm51 = vcmp.eq.s32.totalorder %v49, 0
    %v52 = vsel %vm50, -inf, inf
    %v53 = vsel %vm51, -inf, inf
    %vm54 = vcmp.eq.s32.totalorder %v48, 15
    %vm55 = vcmp.eq.s32.totalorder %v49, 15
    %v56 = vsel %vm54, -inf, inf
    %v57 = vsel %vm55, -inf, inf
    %vm58 = vcmp.lt.s32.totalorder %v24, 16
    %vm59 = vcmp.lt.s32.totalorder %v25, 16
    %v60 = vsel %vm58, -inf, inf
    %v61 = vsel %vm59, -inf, inf
    %vm62 = vcmp.ge.s32.totalorder %v24, 240
    %vm63 = vcmp.ge.s32.totalorder %v25, 240
    %v64 = vsel %vm62, -inf, inf
    %v65 = vsel %vm63, -inf, inf
    %66 = vrot.lane.b32.xlu0 %v21, 1
    %v67 = vpop.permute.xlu0 %66
    %68 = vrot.lane.b32.xlu0 %v22, 1
    %v69 = vpop.permute.xlu0 %68
    %vm70 = vcmp.lt.s32.totalorder %v24, 1
    %v71 = vsel %vm70, %v67, %v69
    %v72 = vsel %vm70, %v69, %v67
    %v73 = vmin.f32 %v72, %v52
    %v74 = vmin.f32 %v71, %v53
    %75 = vrot.lane.b32.xlu0 %v21, 127
    %v76 = vpop.permute.xlu0 %75
    %77 = vrot.lane.b32.xlu0 %v22, 127
    %v78 = vpop.permute.xlu0 %77
    %vm79 = vcmp.lt.s32.totalorder %v24, 127
    %v80 = vsel %vm79, %v76, %v78
    %v81 = vsel %vm79, %v78, %v76
    %v82 = vmin.f32 %v80, %v56
    %v83 = vmin.f32 %v81, %v57
    %v84 = vmax.f32 %v73, %v21
    %v85 = vmax.f32 %v74, %v22
    %v86 = vmax.f32 %v84, %v82
    %v87 = vmax.f32 %v85, %v83
    %88 = vrot.lane.b32.xlu0 %v86, 16
    %v89 = vpop.permute.xlu0 %88
    %90 = vrot.lane.b32.xlu0 %v87, 16
    %v91 = vpop.permute.xlu0 %90
    %v92 = vsel %vm58, %v89, %v91
    %v93 = vsel %vm58, %v91, %v89
    %v94 = vmin.f32 %v93, %v60
    %v95 = vmin.f32 %v92, %v61
    %96 = vrot.lane.b32.xlu0 %v86, 112
    %v97 = vpop.permute.xlu0 %96
    %98 = vrot.lane.b32.xlu0 %v87, 112
    %v99 = vpop.permute.xlu0 %98
    %vm100 = vcmp.lt.s32.totalorder %v24, 112
    %v101 = vsel %vm100, %v97, %v99
    %v102 = vsel %vm100, %v99, %v97
    %v103 = vmin.f32 %v101, %v64
    %v104 = vmin.f32 %v102, %v65
    %v105 = vmax.f32 %v94, %v86
    %v106 = vmax.f32 %v95, %v87
    %v107 = vmax.f32 %v105, %v103
    %v108 = vmax.f32 %v106, %v104
    %109 = vst [vmem:[#allocation5] sm:$0xff] %v107
    %110 = vst [vmem:[#allocation5 + $0x8] sm:$0xff] %v108
    // Predicated region
    $region10: #{tpu_custom_call.1} parent=1 // pred_check
      _
    $region11: #{tpu_custom_call.1} parent=1 // pred_check_branch
      %112 = sbr.rel (0) target = $region13
    $region12: #{tpu_custom_call.1} parent=1 // pred_region
      %s114 = ssub.s32 256, 256
      %115 = vsyncadd [#allocation4], %s114
      %s117 = sshll.u32 [#allocation5], 4
      %s118 = int_to_ptr.vmem [resolvable:$true] %s117
      %120 = dma.vmem_to_hbm [thread:$0]  %s118, 256, %s1, [#allocation4]
    $region13: #{tpu_custom_call.1} parent=1 // pred_fallthru
      _
    // Predicated region
    $region14: #{tpu_custom_call.1} parent=1 // pred_check
      _
    $region15: #{tpu_custom_call.1} parent=1 // pred_check_branch
      %122 = sbr.rel (0) target = $region17
    $region16: #{tpu_custom_call.1} parent=1 // pred_region
      %123 = dma.done [#allocation4], 256
    $region17: #{tpu_custom_call.1} parent=1 // pred_fallthru
      _
    %124 = vsyncpa [#allocation3], 1
    %125 = vsyncpa [#allocation4], 1

</llo_original>
